<compile_context>
chip_gen: v5e
topology: v5e:2x2
jax: 0.10.0
libtpu: 0.0.40
codegen_flags: <defaults>
</compile_context>

<pallas_src>
import jax
import jax.numpy as jnp
from jax import lax
from jax.experimental import pallas as pl
from jax.experimental.pallas import tpu as pltpu

_EPS = 1e-5


# ----------------------------------------------------------------------------
# Kernels
# ----------------------------------------------------------------------------
def _ln_lastdim_kernel(x_ref, w_ref, b_ref, o_ref):
    """LayerNorm over the last (lane) axis of a (TM, C) tile."""
    x = x_ref[...].astype(jnp.float32)                    # (TM, C)
    mu = jnp.mean(x, axis=-1, keepdims=True)               # (TM, 1)  XLU reduce
    xc = x - mu
    var = jnp.mean(xc * xc, axis=-1, keepdims=True)        # biased (unbiased=False)
    inv = lax.rsqrt(var + _EPS)                             # EUP rsqrt
    w = w_ref[...].astype(jnp.float32)                      # (1, C) broadcasts
    b = b_ref[...].astype(jnp.float32)                      # (1, C)
    o_ref[...] = (xc * inv * w + b).astype(o_ref.dtype)


def _ln_channels_first_kernel(x_ref, w_ref, b_ref, o_ref):
    """LayerNorm over the channel (sublane) axis of a (C, TN) tile.

    Spatial positions live on the 128-lane axis -> lane-dense loads/stores even
    when C < 128 (Restormer uses C = 48 / 96 at the top levels).
    """
    x = x_ref[...].astype(jnp.float32)                      # (C, TN)
    mu = jnp.mean(x, axis=0, keepdims=True)                  # (1, TN) sublane reduce
    xc = x - mu
    var = jnp.mean(xc * xc, axis=0, keepdims=True)
    inv = lax.rsqrt(var + _EPS)
    w = w_ref[...].astype(jnp.float32)                       # (C, 1) broadcasts
    b = b_ref[...].astype(jnp.float32)                       # (C, 1)
    o_ref[...] = (xc * inv * w + b).astype(o_ref.dtype)


# ----------------------------------------------------------------------------
# Tile-size selection: size blocks by bytes, keep >= ~8 grid steps.
# ----------------------------------------------------------------------------
def _sublane_align(itemsize):
    return 8 if itemsize >= 4 else (16 if itemsize == 2 else 32)


def _pick_row_tile(M, C, itemsize, *, target_bytes, min_grid=8):
    align = _sublane_align(itemsize)
    if M <= align:
        return M                                            # full-extent block (legal)
    tm = max(align, ((target_bytes // (C * itemsize)) // align) * align)
    tm = min(tm, (M // align) * align)
    # Keep enough grid steps for megacore sharding + DMA/compute overlap.
    if -(-M // tm) < min_grid:
        tm_g = max(align, ((-(-M // min_grid) + align - 1) // align) * align)
        tm = min(tm, tm_g)
    return tm


def _pick_lane_tile(N, C, itemsize, *, target_bytes, min_grid=8, batch=1):
    if N <= 128:
        return N                                             # full-extent block (legal)
    tn = max(128, ((target_bytes // (C * itemsize)) // 128) * 128)
    tn = min(tn, (N // 128) * 128)
    steps_needed = max(1, min_grid // max(1, batch))
    if -(-N // tn) < steps_needed:
        tn_g = max(128, ((-(-N // steps_needed) + 127) // 128) * 128)
        tn = min(tn, tn_g)
    return tn


# ----------------------------------------------------------------------------
# Wrapper 1: exact module semantics -- normalize over the LAST dim of x.
# x: (..., C), weight/bias: (C,).
# ----------------------------------------------------------------------------
def withbias_layernorm(x, weight, bias, *, target_block_bytes=2 * 1024 * 1024):
    orig_shape = x.shape
    C = orig_shape[-1]
    M = 1
    for d in orig_shape[:-1]:
        M *= d

    x2 = x.reshape(M, C)
    w2 = weight.reshape(1, C)
    b2 = bias.reshape(1, C)

    itemsize = jnp.dtype(x.dtype).itemsize
    tm = _pick_row_tile(M, C, itemsize, target_bytes=target_block_bytes)
    grid = (pl.cdiv(M, tm),)

    cost = pl.CostEstimate(
        flops=int(7 * M * C),
        transcendentals=int(M),
        bytes_accessed=int(2 * M * C * itemsize + 2 * C * jnp.dtype(weight.dtype).itemsize),
    )

    out = pl.pallas_call(
        _ln_lastdim_kernel,
        out_shape=jax.ShapeDtypeStruct((M, C), x.dtype),
        grid=grid,
        in_specs=[
            pl.BlockSpec((tm, C), lambda i: (i, 0)),
            pl.BlockSpec((1, C), lambda i: (0, 0)),
            pl.BlockSpec((1, C), lambda i: (0, 0)),
        ],
        out_specs=pl.BlockSpec((tm, C), lambda i: (i, 0)),
        compiler_params=pltpu.CompilerParams(dimension_semantics=("parallel",)),
        cost_estimate=cost,
    )(x2, w2, b2)
    return out.reshape(orig_shape)


# ----------------------------------------------------------------------------
# Wrapper 2: lane-dense channels-first variant.
# x: (B, C, *spatial), weight/bias: (C,).  Equivalent to rearranging to
# (..., C), applying WithBias_LayerNorm over C, and rearranging back -- the way
# Restormer uses this LN -- but with no transposes and spatial on the lane axis.
# ----------------------------------------------------------------------------
def withbias_layernorm_channels_first(x, weight, bias, *,
                                      target_block_bytes=2 * 1024 * 1024):
    orig_shape = x.shape
    B, C = orig_shape[0], orig_shape[1]
    N = 1
    for d in orig_shape[2:]:
        N *= d

    x3 = x.reshape(B, C, N)
    w2 = weight.reshape(C, 1)
    b2 = bias.reshape(C, 1)

    itemsize = jnp.dtype(x.dtype).itemsize
    tn = _pick_lane_tile(N, C, itemsize, target_bytes=target_block_bytes, batch=B)
    grid = (B, pl.cdiv(N, tn))

    cost = pl.CostEstimate(
        flops=int(7 * B * N * C),
        transcendentals=int(B * N),
        bytes_accessed=int(2 * B * N * C * itemsize + 2 * C * jnp.dtype(weight.dtype).itemsize),
    )

    out = pl.pallas_call(
        _ln_channels_first_kernel,
        out_shape=jax.ShapeDtypeStruct((B, C, N), x.dtype),
        grid=grid,
        in_specs=[
            pl.BlockSpec((None, C, tn), lambda b, j: (b, 0, j)),
            pl.BlockSpec((C, 1), lambda b, j: (0, 0)),
            pl.BlockSpec((C, 1), lambda b, j: (0, 0)),
        ],
        out_specs=pl.BlockSpec((None, C, tn), lambda b, j: (b, 0, j)),
        compiler_params=pltpu.CompilerParams(
            dimension_semantics=("parallel", "parallel")),
        cost_estimate=cost,
    )(x3, w2, b2)
    return out.reshape(orig_shape)


# ----------------------------------------------------------------------------
# Pure-JAX references.
# ----------------------------------------------------------------------------
def _layernorm_ref(x, weight, bias):
    mu = jnp.mean(x, axis=-1, keepdims=True)
    var = jnp.mean((x - mu) ** 2, axis=-1, keepdims=True)
    return (x - mu) / jnp.sqrt(var + _EPS) * weight + bias


def _channels_first_ref(x, weight, bias):
    xt = jnp.moveaxis(x, 1, -1)            # (B, *spatial, C)
    y = _layernorm_ref(xt, weight, bias)
    return jnp.moveaxis(y, -1, 1)


if __name__ == "__main__":
    key = jax.random.PRNGKey(0)
    k1, k2, k3, k4 = jax.random.split(key, 4)

    C = 48
    weight = 1.0 + 0.1 * jax.random.normal(k2, (C,), dtype=jnp.float32)
    bias = 0.1 * jax.random.normal(k3, (C,), dtype=jnp.float32)

    fn_last = jax.jit(withbias_layernorm, static_argnames=("target_block_bytes",))
    fn_cf = jax.jit(withbias_layernorm_channels_first,
                    static_argnames=("target_block_bytes",))

    # --- Case 1: module semantics, (B, H*W, C) layout, f32 ---------------------
    B, S = 2, 256                     # batch=2, spatial=16x16
    x = jax.random.normal(k1, (B, S, C), dtype=jnp.float32)
    out = fn_last(x, weight, bias)
    jax.block_until_ready(out)
    ref = _layernorm_ref(x, weight, bias)
    assert out.shape == x.shape
    assert jnp.allclose(out, ref, atol=1e-4, rtol=1e-4), "mismatch (last-dim f32)"

    # --- Case 2: lane-dense channels-first path on (B, C, H, W) ----------------
    x_cf = jax.random.normal(k4, (2, C, 16, 16), dtype=jnp.float32)
    out_cf = fn_cf(x_cf, weight, bias)
    jax.block_until_ready(out_cf)
    ref_cf = _channels_first_ref(x_cf, weight, bias)
    assert out_cf.shape == x_cf.shape
    assert jnp.allclose(out_cf, ref_cf, atol=1e-4, rtol=1e-4), "mismatch (channels-first)"

    # --- Case 3: bf16 I/O path (stats in f32 inside the kernel) ----------------
    out_bf = fn_last(x.astype(jnp.bfloat16), weight, bias)
    jax.block_until_ready(out_bf)
    assert out_bf.dtype == jnp.bfloat16
    assert jnp.allclose(out_bf.astype(jnp.float32), ref, atol=5e-2, rtol=5e-2), \
        "mismatch (bf16)"

    # --- Case 4: row count not divisible by the tile -> masked tail block ------
    x_odd = jax.random.normal(k4, (3, 100, 32), dtype=jnp.float32)   # M = 300
    w32 = jnp.ones((32,), jnp.float32)
    b32 = jnp.zeros((32,), jnp.float32)
    out_odd = fn_last(x_odd, w32, b32)
    jax.block_until_ready(out_odd)
    ref_odd = _layernorm_ref(x_odd, w32, b32)
    assert jnp.allclose(out_odd, ref_odd, atol=1e-4, rtol=1e-4), "mismatch (tail block)"

    print("KERNEL_OK")
</pallas_src>

<mosaic_0001>
module attributes {stable_mosaic.version = 11 : i64} {
  func.func @_ln_lastdim_kernel(%arg0: i32, %arg1: memref<64x48xf32, #tpu.memory_space<vmem>>, %arg2: memref<1x48xf32, #tpu.memory_space<vmem>>, %arg3: memref<1x48xf32, #tpu.memory_space<vmem>>, %arg4: memref<64x48xf32, #tpu.memory_space<vmem>>) attributes {dimension_semantics = [#tpu.dimension_semantics<parallel>], iteration_bounds = array<i64: 8>, scalar_prefetch = 0 : i64, scratch_operands = 0 : i64, tpu.core_type = #tpu.core_type<tc>, window_params = [{transform_indices = @transform_0, window_bounds = array<i64: 64, 48>}, {pipeline_mode = #tpu.pipeline_mode<synchronous>, transform_indices = @transform_1, window_bounds = array<i64: 1, 48>}, {pipeline_mode = #tpu.pipeline_mode<synchronous>, transform_indices = @transform_2, window_bounds = array<i64: 1, 48>}, {transform_indices = @transform_3, window_bounds = array<i64: 64, 48>}]} {
    %c0 = arith.constant 0 : index
    %c0_0 = arith.constant 0 : index
    %0 = vector.load %arg1[%c0, %c0_0] : memref<64x48xf32, #tpu.memory_space<vmem>>, vector<64x48xf32>
    %cst = arith.constant dense<0.000000e+00> : vector<64xf32>
    %1 = vector.multi_reduction <add>, %0, %cst [1] : vector<64x48xf32> to vector<64xf32>
    %2 = vector.shape_cast %1 : vector<64xf32> to vector<64x1xf32>
    %cst_1 = arith.constant 4.800000e+01 : f32
    %3 = vector.broadcast %cst_1 : f32 to vector<64x1xf32>
    %4 = arith.divf %2, %3 : vector<64x1xf32>
    %5 = vector.broadcast %4 : vector<64x1xf32> to vector<64x48xf32>
    %6 = arith.subf %0, %5 : vector<64x48xf32>
    %7 = arith.mulf %6, %6 : vector<64x48xf32>
    %cst_2 = arith.constant dense<0.000000e+00> : vector<64xf32>
    %8 = vector.multi_reduction <add>, %7, %cst_2 [1] : vector<64x48xf32> to vector<64xf32>
    %9 = vector.shape_cast %8 : vector<64xf32> to vector<64x1xf32>
    %cst_3 = arith.constant 4.800000e+01 : f32
    %10 = vector.broadcast %cst_3 : f32 to vector<64x1xf32>
    %11 = arith.divf %9, %10 : vector<64x1xf32>
    %cst_4 = arith.constant 9.99999974E-6 : f32
    %12 = vector.broadcast %cst_4 : f32 to vector<64x1xf32>
    %13 = arith.addf %11, %12 : vector<64x1xf32>
    %14 = math.rsqrt %13 : vector<64x1xf32>
    %c0_5 = arith.constant 0 : index
    %c0_6 = arith.constant 0 : index
    %15 = vector.load %arg2[%c0_5, %c0_6] : memref<1x48xf32, #tpu.memory_space<vmem>>, vector<1x48xf32>
    %c0_7 = arith.constant 0 : index
    %c0_8 = arith.constant 0 : index
    %16 = vector.load %arg3[%c0_7, %c0_8] : memref<1x48xf32, #tpu.memory_space<vmem>>, vector<1x48xf32>
    %17 = vector.broadcast %14 : vector<64x1xf32> to vector<64x48xf32>
    %18 = arith.mulf %6, %17 : vector<64x48xf32>
    %19 = vector.broadcast %15 : vector<1x48xf32> to vector<64x48xf32>
    %20 = arith.mulf %18, %19 : vector<64x48xf32>
    %21 = vector.broadcast %16 : vector<1x48xf32> to vector<64x48xf32>
    %22 = arith.addf %20, %21 : vector<64x48xf32>
    %c0_9 = arith.constant 0 : index
    %c0_10 = arith.constant 0 : index
    %23 = vector.load %arg4[%c0_9, %c0_10] : memref<64x48xf32, #tpu.memory_space<vmem>>, vector<64x48xf32>
    tpu.vector_store %arg4[%c0_9, %c0_10], %22 {strides = array<i32>} : memref<64x48xf32, #tpu.memory_space<vmem>>, vector<64x48xf32>,
    return
  }
  func.func @transform_0(%arg0: i32) -> (i32, i32) {
    %c0_i32 = arith.constant 0 : i32
    %c0_i32_0 = arith.constant 0 : i32
    return %arg0, %c0_i32 : i32, i32
  }
  func.func @transform_1(%arg0: i32) -> (i32, i32) {
    %c0_i32 = arith.constant 0 : i32
    %c0_i32_0 = arith.constant 0 : i32
    %c0_i32_1 = arith.constant 0 : i32
    return %c0_i32, %c0_i32_0 : i32, i32
  }
  func.func @transform_2(%arg0: i32) -> (i32, i32) {
    %c0_i32 = arith.constant 0 : i32
    %c0_i32_0 = arith.constant 0 : i32
    %c0_i32_1 = arith.constant 0 : i32
    return %c0_i32, %c0_i32_0 : i32, i32
  }
  func.func @transform_3(%arg0: i32) -> (i32, i32) {
    %c0_i32 = arith.constant 0 : i32
    %c0_i32_0 = arith.constant 0 : i32
    return %arg0, %c0_i32 : i32, i32
  }
}

</mosaic_0001>

<llo_original>
// kernel: withbias_layernorm.1
$region0: #{withbias_layernorm.1}
  #allocation0 [shape = 'u32[]', space=smem, size = 0x4, offset = 0x4, fixed_abs, tag = 'smem constant byte address 0x4 - core index']
  #allocation1 [shape = 'u32[72,128]{1,0:T(1,128)}', space=vmem, size = 0x9000, scoped, tag = 'internal scratch']
  %s0 = inlined_call_operand.vmem [shape: f32[512,48], index: 0, kind: input, shape index: {}]
  %s1 = inlined_call_operand.vmem [shape: f32[1,48], index: 1, kind: input, shape index: {}]
  %s2 = inlined_call_operand.vmem [shape: f32[1,48], index: 2, kind: input, shape index: {}]
  %s3 = inlined_call_operand.vmem [shape: f32[512,48], index: 3, kind: output, shape index: {}]
  %s4 = sld [smem:[#allocation0]]
  $region45: #{withbias_layernorm.1} parent=0
    _
  %s6 = ssub.s32 1, %s4
  %s7 = scalar_select 0, %s6, %s4
  loop: start=0, step=1, limit=10
  $region2: #{withbias_layernorm.1} parent=0 // loop_pre_header
    _
  $region3: #{withbias_layernorm.1} parent=0 // loop_header
    %s9 = sphi 0, %s13
    %p10 = scmp.ge.s32.totalorder %s9, 10
    %s19 = sphi 0, %s21
    %s22 = sphi 0, %s19
    %s23 = sphi 0, %s22
    %s39 = sphi 0, %s23
    %s43 = sphi 0, %s43
    %s45 = sphi 0, %s43
    %s46 = sphi 0, %s45
    %s60 = sphi 0, %s46
    %s64 = sphi 0, %s64
    %s66 = sphi 0, %s64
    %s67 = sphi 0, %s66
    %s81 = sphi 0, %s67
    %s87 = sphi 0, %s89
    %s90 = sphi 0, %s87
    %s91 = sphi 0, %s90
    %s107 = sphi 0, %s91
  $region4: #{withbias_layernorm.1} parent=0 // loop_header_branch
    %12 = sbr.rel (%p10) target = $region8
  $region5: #{withbias_layernorm.1} parent=0 // loop_body
    %s14 = ssub.s32 %s9, 1
    %s15 = ssub.s32 %s9, 2
    %s16 = sadd.s32 %s9, 1
    %s17 = ssub.s32 %s9, %s16
    %p18 = scmp.eq.s32.totalorder %s17, 0
    %s20 = sadd.s32 %s19, 1
    %s21 = scalar_select %p18, %s19, %s20
    %p24 = pneg %p18
    %p25 = scmp.eq.s32.totalorder %s9, 7
    %p26 = por %p24, %p25
    %p27 = scmp.ne.s32.totalorder %s19, %s22
    %p28 = scmp.eq.s32.totalorder %s9, 0
    %p29 = por %p27, %p28
    %p30 = scmp.ne.s32.totalorder %s19, %s22
    %p31 = scmp.eq.s32.totalorder %s14, 7
    %p32 = por %p30, %p31
    %p33 = scmp.ne.s32.totalorder %s22, %s23
    %p34 = scmp.eq.s32.totalorder %s14, 0
    %p35 = por %p33, %p34
    %p36 = scmp.ne.s32.totalorder %s22, %s23
    %p37 = scmp.eq.s32.totalorder %s15, 7
    %p38 = por %p36, %p37
    %p40 = scmp.ne.s32.totalorder %s23, %s39
    %p41 = scmp.eq.s32.totalorder %s15, 0
    %p42 = por %p40, %p41
    %s44 = sadd.s32 %s43, 1
    %p47 = scmp.eq.s32.totalorder %s9, 7
    %p48 = scmp.ne.s32.totalorder %s43, %s45
    %p49 = scmp.eq.s32.totalorder %s9, 0
    %p50 = por %p48, %p49
    %p51 = scmp.ne.s32.totalorder %s43, %s45
    %p52 = scmp.eq.s32.totalorder %s14, 7
    %p53 = por %p51, %p52
    %p54 = scmp.ne.s32.totalorder %s45, %s46
    %p55 = scmp.eq.s32.totalorder %s14, 0
    %p56 = por %p54, %p55
    %p57 = scmp.ne.s32.totalorder %s45, %s46
    %p58 = scmp.eq.s32.totalorder %s15, 7
    %p59 = por %p57, %p58
    %p61 = scmp.ne.s32.totalorder %s46, %s60
    %p62 = scmp.eq.s32.totalorder %s15, 0
    %p63 = por %p61, %p62
    %s65 = sadd.s32 %s64, 1
    %p68 = scmp.eq.s32.totalorder %s9, 7
    %p69 = scmp.ne.s32.totalorder %s64, %s66
    %p70 = scmp.eq.s32.totalorder %s9, 0
    %p71 = por %p69, %p70
    %p72 = scmp.ne.s32.totalorder %s64, %s66
    %p73 = scmp.eq.s32.totalorder %s14, 7
    %p74 = por %p72, %p73
    %p75 = scmp.ne.s32.totalorder %s66, %s67
    %p76 = scmp.eq.s32.totalorder %s14, 0
    %p77 = por %p75, %p76
    %p78 = scmp.ne.s32.totalorder %s66, %s67
    %p79 = scmp.eq.s32.totalorder %s15, 7
    %p80 = por %p78, %p79
    %p82 = scmp.ne.s32.totalorder %s67, %s81
    %p83 = scmp.eq.s32.totalorder %s15, 0
    %p84 = por %p82, %p83
    %s85 = ssub.s32 %s9, %s16
    %p86 = scmp.eq.s32.totalorder %s85, 0
    %s88 = sadd.s32 %s87, 1
    %s89 = scalar_select %p86, %s87, %s88
    %p92 = pneg %p86
    %p93 = scmp.eq.s32.totalorder %s9, 7
    %p94 = por %p92, %p93
    %p95 = scmp.ne.s32.totalorder %s87, %s90
    %p96 = scmp.eq.s32.totalorder %s9, 0
    %p97 = por %p95, %p96
    %p98 = scmp.ne.s32.totalorder %s87, %s90
    %p99 = scmp.eq.s32.totalorder %s14, 7
    %p100 = por %p98, %p99
    %p101 = scmp.ne.s32.totalorder %s90, %s91
    %p102 = scmp.eq.s32.totalorder %s14, 0
    %p103 = por %p101, %p102
    %p104 = scmp.ne.s32.totalorder %s90, %s91
    %p105 = scmp.eq.s32.totalorder %s15, 7
    %p106 = por %p104, %p105
    %p108 = scmp.ne.s32.totalorder %s91, %s107
    %p109 = scmp.eq.s32.totalorder %s15, 0
    %p110 = por %p108, %p109
    %p111 = scmp.le.s32.totalorder 1, %s9
    %p112 = scmp.lt.s32.totalorder %s9, 9
    %p113 = pnand %p111, %p112
    %p114 = pneg %p113
    // Predicated region
    $region9: #{withbias_layernorm.1} parent=5 // pred_check
      _
    $region10: #{withbias_layernorm.1} parent=5 // pred_check_branch
      %116 = sbr.rel (%p113) target = $region12
    $region11: #{withbias_layernorm.1} parent=5 // pred_region
      %s117 = ssub.s32 %s9, 1
      // Predicated region
      $region13: #{withbias_layernorm.1} parent=11 // pred_check
        %p118 = pneg %p56
      $region14: #{withbias_layernorm.1} parent=11 // pred_check_branch
        %120 = sbr.rel (%p118) target = $region16
      $region15: #{withbias_layernorm.1} parent=11 // pred_region
        _
      $region16: #{withbias_layernorm.1} parent=11 // pred_fallthru
        _
      // Predicated region
      $region17: #{withbias_layernorm.1} parent=11 // pred_check
        %p121 = pneg %p77
      $region18: #{withbias_layernorm.1} parent=11 // pred_check_branch
        %123 = sbr.rel (%p121) target = $region20
      $region19: #{withbias_layernorm.1} parent=11 // pred_region
        _
      $region20: #{withbias_layernorm.1} parent=11 // pred_fallthru
        _
    $region12: #{withbias_layernorm.1} parent=5 // pred_fallthru
      _
    %p124 = scmp.lt.s32.totalorder %s9, 8
    // Predicated region
    $region21: #{withbias_layernorm.1} parent=5 // pred_check
      %p125 = pneg %p124
    $region22: #{withbias_layernorm.1} parent=5 // pred_check_branch
      %127 = sbr.rel (%p125) target = $region24
    $region23: #{withbias_layernorm.1} parent=5 // pred_region
      // Predicated region
      $region25: #{withbias_layernorm.1} parent=23 // pred_check
        %p128 = pneg %p29
      $region26: #{withbias_layernorm.1} parent=23 // pred_check_branch
        %130 = sbr.rel (%p128) target = $region28
      $region27: #{withbias_layernorm.1} parent=23 // pred_region
        %s131 = smul.u32 8, %s9
        %p132 = scmp.lt.s32.totalorder %s131, 63
        %s133 = scalar_select %p132, %s131, 63
        %s134 = smul.addr %s133, 8
        %s135 = scalar_lea.vmem %s0, %s134
        %s136 = smul.u32 8, %s9
      $region28: #{withbias_layernorm.1} parent=23 // pred_fallthru
        _
    $region24: #{withbias_layernorm.1} parent=5 // pred_fallthru
      _
    %p137 = scmp.le.s32.totalorder 1, %s9
    %p138 = scmp.lt.s32.totalorder %s9, 9
    %p139 = pnand %p137, %p138
    %p140 = pneg %p139
    // Predicated region
    $region29: #{withbias_layernorm.1} parent=5 // pred_check
      _
    $region30: #{withbias_layernorm.1} parent=5 // pred_check_branch
      %142 = sbr.rel (%p139) target = $region32
    $region31: #{withbias_layernorm.1} parent=5 // pred_region
      %s143 = ssub.s32 %s9, 1
      %s144 = smul.u32 8, %s14
      %p145 = scmp.lt.s32.totalorder %s144, 63
      %s146 = scalar_select %p145, %s144, 63
      %s147 = smul.addr %s146, 8
      %s148 = scalar_lea.vmem %s0, %s147
      %p149 = pneg %p35
      %p150 = pneg %p32
      %p151 = pneg %p56
      %p152 = pneg %p53
      %p153 = pneg %p77
      %p154 = pneg %p74
      %p155 = pneg %p103
      %p156 = pneg %p100
      %s157 = smul.u32 8, %s14
      %p158 = scmp.lt.s32.totalorder %s157, 63
      %s159 = scalar_select %p158, %s157, 63
      %s160 = smul.addr %s159, 8
      %s161 = scalar_lea.vmem %s3, %s160
      %s162 = smul.u32 8, %s14
      %p163 = scmp.lt.s32.totalorder %s162, 63
      %s164 = scalar_select %p163, %s162, 63
      %s165 = smul.addr %s164, 8
      %s166 = scalar_lea.vmem %s0, %s165
      %s167 = smul.u32 8, %s14
      %s168 = smul.u32 8, %s14
      %p169 = scmp.lt.s32.totalorder %s168, 63
      %s170 = scalar_select %p169, %s168, 63
      %s171 = smul.addr %s170, 8
      %s172 = scalar_lea.vmem %s3, %s171
      %s173 = smul.u32 8, %s14
      %v174 = vld [vmem:[%s166] sm:$0xff]
      %v175 = vld [vmem:[%s166 + $0x8] sm:$0xff]
      %v176 = vld [vmem:[%s166 + $0x10] sm:$0xff]
      %v177 = vld [vmem:[%s166 + $0x18] sm:$0xff]
      %v178 = vld [vmem:[%s166 + $0x20] sm:$0xff]
      %v179 = vld [vmem:[%s166 + $0x28] sm:$0xff]
      %v180 = vld [vmem:[%s166 + $0x30] sm:$0xff]
      %v181 = vld [vmem:[%s166 + $0x38] sm:$0xff]
      %vm182 = vcmask 392192
      %v183 = vsel %vm182, %v174, 0.0
      %184 = vadd.xlane.f32.xlu0 %v183
      %v185 = vpop.xlane.xlu0 %184
      %v186 = vsel %vm182, %v175, 0.0
      %187 = vadd.xlane.f32.xlu0 %v186
      %v188 = vpop.xlane.xlu0 %187
      %v189 = vsel %vm182, %v176, 0.0
      %190 = vadd.xlane.f32.xlu0 %v189
      %v191 = vpop.xlane.xlu0 %190
      %v192 = vsel %vm182, %v177, 0.0
      %193 = vadd.xlane.f32.xlu0 %v192
      %v194 = vpop.xlane.xlu0 %193
      %v195 = vsel %vm182, %v178, 0.0
      %196 = vadd.xlane.f32.xlu0 %v195
      %v197 = vpop.xlane.xlu0 %196
      %v198 = vsel %vm182, %v179, 0.0
      %199 = vadd.xlane.f32.xlu0 %v198
      %v200 = vpop.xlane.xlu0 %199
      %v201 = vsel %vm182, %v180, 0.0
      %202 = vadd.xlane.f32.xlu0 %v201
      %v203 = vpop.xlane.xlu0 %202
      %v204 = vsel %vm182, %v181, 0.0
      %205 = vadd.xlane.f32.xlu0 %v204
      %v206 = vpop.xlane.xlu0 %205
      %v207 = vrcp.pop 48.0
      %v208 = vmul.f32 48.0, %v207
      %v209 = vsub.f32 1.0, %v208
      %v210 = vmul.f32 %v207, %v209
      %v211 = vadd.f32 %v207, %v210
      %vm212 = vweird.f32 %v207
      %v213 = vsel %vm212, %v207, %v211
      %v214 = vmul.f32 %v185, %v213
      %v215 = vmul.f32 %v188, %v213
      %v216 = vmul.f32 %v191, %v213
      %v217 = vmul.f32 %v194, %v213
      %v218 = vmul.f32 %v197, %v213
      %v219 = vmul.f32 %v200, %v213
      %v220 = vmul.f32 %v203, %v213
      %v221 = vmul.f32 %v206, %v213
      %v222 = vsub.f32 %v174, %v214
      %v223 = vsub.f32 %v175, %v215
      %v224 = vsub.f32 %v176, %v216
      %v225 = vsub.f32 %v177, %v217
      %v226 = vsub.f32 %v178, %v218
      %v227 = vsub.f32 %v179, %v219
      %v228 = vsub.f32 %v180, %v220
      %v229 = vsub.f32 %v181, %v221
      %v230 = vmul.f32 %v222, %v222
      %v231 = vmul.f32 %v223, %v223
      %v232 = vmul.f32 %v224, %v224
      %v233 = vmul.f32 %v225, %v225
      %v234 = vmul.f32 %v226, %v226
      %v235 = vmul.f32 %v227, %v227
      %v236 = vmul.f32 %v228, %v228
      %v237 = vmul.f32 %v229, %v229
      %v238 = vsel %vm182, %v230, 0.0
      %239 = vadd.xlane.f32.xlu0 %v238
      %v240 = vpop.xlane.xlu0 %239
      %v241 = vsel %vm182, %v231, 0.0
      %242 = vadd.xlane.f32.xlu0 %v241
      %v243 = vpop.xlane.xlu0 %242
      %v244 = vsel %vm182, %v232, 0.0
      %245 = vadd.xlane.f32.xlu0 %v244
      %v246 = vpop.xlane.xlu0 %245
      %v247 = vsel %vm182, %v233, 0.0
      %248 = vadd.xlane.f32.xlu0 %v247
      %v249 = vpop.xlane.xlu0 %248
      %v250 = vsel %vm182, %v234, 0.0
      %251 = vadd.xlane.f32.xlu0 %v250
      %v252 = vpop.xlane.xlu0 %251
      %v253 = vsel %vm182, %v235, 0.0
      %254 = vadd.xlane.f32.xlu0 %v253
      %v255 = vpop.xlane.xlu0 %254
      %v256 = vsel %vm182, %v236, 0.0
      %257 = vadd.xlane.f32.xlu0 %v256
      %v258 = vpop.xlane.xlu0 %257
      %v259 = vsel %vm182, %v237, 0.0
      %260 = vadd.xlane.f32.xlu0 %v259
      %v261 = vpop.xlane.xlu0 %260
      %v262 = vmul.f32 %v240, %v213
      %v263 = vmul.f32 %v243, %v213
      %v264 = vmul.f32 %v246, %v213
      %v265 = vmul.f32 %v249, %v213
      %v266 = vmul.f32 %v252, %v213
      %v267 = vmul.f32 %v255, %v213
      %v268 = vmul.f32 %v258, %v213
      %v269 = vmul.f32 %v261, %v213
      %v270 = vadd.f32 %v262, 1e-05
      %v271 = vadd.f32 %v263, 1e-05
      %v272 = vadd.f32 %v264, 1e-05
      %v273 = vadd.f32 %v265, 1e-05
      %v274 = vadd.f32 %v266, 1e-05
      %v275 = vadd.f32 %v267, 1e-05
      %v276 = vadd.f32 %v268, 1e-05
      %v277 = vadd.f32 %v269, 1e-05
      %v278 = vrsqrt.pop %v270
      %v279 = vmul.f32 %v278, %v270
      %v280 = vmul.f32 %v279, %v278
      %v281 = vmul.f32 0.5, %v280
      %v282 = vsub.f32 1.5, %v281
      %v283 = vmul.f32 %v278, %v282
      %vm284 = vweird.f32 %v270
      %vm285 = vweird.f32 %v278
      %vm286 = vmor %vm284, %vm285
      %v287 = vsel %vm286, %v278, %v283
      %v288 = vrsqrt.pop %v271
      %v289 = vmul.f32 %v288, %v271
      %v290 = vmul.f32 %v289, %v288
      %v291 = vmul.f32 0.5, %v290
      %v292 = vsub.f32 1.5, %v291
      %v293 = vmul.f32 %v288, %v292
      %vm294 = vweird.f32 %v271
      %vm295 = vweird.f32 %v288
      %vm296 = vmor %vm294, %vm295
      %v297 = vsel %vm296, %v288, %v293
      %v298 = vrsqrt.pop %v272
      %v299 = vmul.f32 %v298, %v272
      %v300 = vmul.f32 %v299, %v298
      %v301 = vmul.f32 0.5, %v300
      %v302 = vsub.f32 1.5, %v301
      %v303 = vmul.f32 %v298, %v302
      %vm304 = vweird.f32 %v272
      %vm305 = vweird.f32 %v298
      %vm306 = vmor %vm304, %vm305
      %v307 = vsel %vm306, %v298, %v303
      %v308 = vrsqrt.pop %v273
      %v309 = vmul.f32 %v308, %v273
      %v310 = vmul.f32 %v309, %v308
      %v311 = vmul.f32 0.5, %v310
      %v312 = vsub.f32 1.5, %v311
      %v313 = vmul.f32 %v308, %v312
      %vm314 = vweird.f32 %v273
      %vm315 = vweird.f32 %v308
      %vm316 = vmor %vm314, %vm315
      %v317 = vsel %vm316, %v308, %v313
      %v318 = vrsqrt.pop %v274
      %v319 = vmul.f32 %v318, %v274
      %v320 = vmul.f32 %v319, %v318
      %v321 = vmul.f32 0.5, %v320
      %v322 = vsub.f32 1.5, %v321
      %v323 = vmul.f32 %v318, %v322
      %vm324 = vweird.f32 %v274
      %vm325 = vweird.f32 %v318
      %vm326 = vmor %vm324, %vm325
      %v327 = vsel %vm326, %v318, %v323
      %v328 = vrsqrt.pop %v275
      %v329 = vmul.f32 %v328, %v275
      %v330 = vmul.f32 %v329, %v328
      %v331 = vmul.f32 0.5, %v330
      %v332 = vsub.f32 1.5, %v331
      %v333 = vmul.f32 %v328, %v332
      %vm334 = vweird.f32 %v275
      %vm335 = vweird.f32 %v328
      %vm336 = vmor %vm334, %vm335
      %v337 = vsel %vm336, %v328, %v333
      %v338 = vrsqrt.pop %v276
      %v339 = vmul.f32 %v338, %v276
      %v340 = vmul.f32 %v339, %v338
      %v341 = vmul.f32 0.5, %v340
      %v342 = vsub.f32 1.5, %v341
      %v343 = vmul.f32 %v338, %v342
      %vm344 = vweird.f32 %v276
      %vm345 = vweird.f32 %v338
      %vm346 = vmor %vm344, %vm345
      %v347 = vsel %vm346, %v338, %v343
      %v348 = vrsqrt.pop %v277
      %v349 = vmul.f32 %v348, %v277
      %v350 = vmul.f32 %v349, %v348
      %v351 = vmul.f32 0.5, %v350
      %v352 = vsub.f32 1.5, %v351
      %v353 = vmul.f32 %v348, %v352
      %vm354 = vweird.f32 %v277
      %vm355 = vweird.f32 %v348
      %vm356 = vmor %vm354, %vm355
      %v357 = vsel %vm356, %v348, %v353
      %v358 = vld [vmem:[%s1] sm:$0x1]
      %v359 = vld [vmem:[%s2] sm:$0x1]
      %v360 = vmul.f32 %v222, %v287
      %v361 = vmul.f32 %v223, %v297
      %v362 = vmul.f32 %v224, %v307
      %v363 = vmul.f32 %v225, %v317
      %v364 = vmul.f32 %v226, %v327
      %v365 = vmul.f32 %v227, %v337
      %v366 = vmul.f32 %v228, %v347
      %v367 = vmul.f32 %v229, %v357
      %v369 = vperm.slane %v358, 0
      %v371 = vmul.f32 %v360, %v369
      %v372 = vmul.f32 %v361, %v369
      %v373 = vmul.f32 %v362, %v369
      %v374 = vmul.f32 %v363, %v369
      %v375 = vmul.f32 %v364, %v369
      %v376 = vmul.f32 %v365, %v369
      %v377 = vmul.f32 %v366, %v369
      %v378 = vmul.f32 %v367, %v369
      %v380 = vperm.slane %v359, 0
      %v382 = vadd.f32 %v371, %v380
      %v383 = vadd.f32 %v372, %v380
      %v384 = vadd.f32 %v373, %v380
      %v385 = vadd.f32 %v374, %v380
      %v386 = vadd.f32 %v375, %v380
      %v387 = vadd.f32 %v376, %v380
      %v388 = vadd.f32 %v377, %v380
      %v389 = vadd.f32 %v378, %v380
      %390 = vst.msk [vmem:[%s172] sm:$0xff] %vm182, %v382
      %391 = vst.msk [vmem:[%s172 + $0x8] sm:$0xff] %vm182, %v383
      %392 = vst.msk [vmem:[%s172 + $0x10] sm:$0xff] %vm182, %v384
      %393 = vst.msk [vmem:[%s172 + $0x18] sm:$0xff] %vm182, %v385
      %394 = vst.msk [vmem:[%s172 + $0x20] sm:$0xff] %vm182, %v386
      %395 = vst.msk [vmem:[%s172 + $0x28] sm:$0xff] %vm182, %v387
      %396 = vst.msk [vmem:[%s172 + $0x30] sm:$0xff] %vm182, %v388
      %397 = vst.msk [vmem:[%s172 + $0x38] sm:$0xff] %vm182, %v389
      %s398 = smul.u32 8, %s14
      %p399 = scmp.lt.s32.totalorder %s398, 63
      %s400 = scalar_select %p399, %s398, 63
      %s401 = smul.addr %s400, 8
      %s402 = scalar_lea.vmem %s3, %s401
      // Predicated region
      $region33: #{withbias_layernorm.1} parent=31 // pred_check
        %p403 = pneg %p100
      $region34: #{withbias_layernorm.1} parent=31 // pred_check_branch
        %405 = sbr.rel (%p403) target = $region36
      $region35: #{withbias_layernorm.1} parent=31 // pred_region
        %s406 = smul.u32 8, %s14
      $region36: #{withbias_layernorm.1} parent=31 // pred_fallthru
        _
    $region32: #{withbias_layernorm.1} parent=5 // pred_fallthru
      _
    %p407 = scmp.le.s32.totalorder 2, %s9
    // Predicated region
    $region37: #{withbias_layernorm.1} parent=5 // pred_check
      %p408 = pneg %p407
    $region38: #{withbias_layernorm.1} parent=5 // pred_check_branch
      %410 = sbr.rel (%p408) target = $region40
    $region39: #{withbias_layernorm.1} parent=5 // pred_region
      %s411 = ssub.s32 %s9, 2
      // Predicated region
      $region41: #{withbias_layernorm.1} parent=39 // pred_check
        %p412 = pneg %p106
      $region42: #{withbias_layernorm.1} parent=39 // pred_check_branch
        %414 = sbr.rel (%p412) target = $region44
      $region43: #{withbias_layernorm.1} parent=39 // pred_region
        %s415 = smul.u32 8, %s15
        %p416 = scmp.lt.s32.totalorder %s415, 63
        %s417 = scalar_select %p416, %s415, 63
        %s418 = smul.addr %s417, 8
        %s419 = scalar_lea.vmem %s3, %s418
      $region44: #{withbias_layernorm.1} parent=39 // pred_fallthru
        _
    $region40: #{withbias_layernorm.1} parent=5 // pred_fallthru
      _
  $region6: #{withbias_layernorm.1} parent=0 // loop_footer
    %s13 = sadd.s32 1, %s9
  $region7: #{withbias_layernorm.1} parent=0 // loop_footer_branch
    %8 = sbr.rel target = $region3
  $region8: #{withbias_layernorm.1} parent=0 // loop_exit
    _

</llo_original>
